<compile_context>
chip_gen: v7x
topology: tpu7x:2x2x1
jax: 0.10.0
libtpu: 0.0.40
codegen_flags: <defaults>
</compile_context>

<pallas_src>
import functools

import jax
import jax.numpy as jnp
from jax.experimental import pallas as pl
from jax.experimental.pallas import tpu as pltpu

D_IN, D_H1, D_H2, D_OUT = 30, 20, 10, 2
PAD = 128  # hidden feature dims padded to the 128-lane vreg width


def _round_up(n, m):
    return ((n + m - 1) // m) * m


def _pad2(a, rows, cols, dtype):
    return jnp.zeros((rows, cols), dtype).at[: a.shape[0], : a.shape[1]].set(
        a.astype(dtype)
    )


def prepare_params(params):
    """One-time parameter prep (runs once, outside the jitted forward).

    Transposes nn.Linear weights to (in_features, out_features), zero-pads the
    hidden dims to the 128-lane width, and casts weights to bf16. Biases stay
    f32 (added after the f32-accumulated matmul). Zero-padded lanes stay zero
    through ReLU, so lanes 20..127 / 10..127 never contaminate later layers.
    """
    (w1, b1), (w2, b2), (w3, b3) = params
    w1_p = _pad2(w1.T, D_IN, PAD, jnp.bfloat16)       # (30, 128)
    w2_p = _pad2(w2.T, PAD, PAD, jnp.bfloat16)        # (128, 128)
    w3_p = _pad2(w3.T, PAD, D_OUT, jnp.bfloat16)      # (128, 2)
    b1_p = _pad2(b1[None, :], 1, PAD, jnp.float32)    # (1, 128)
    b2_p = _pad2(b2[None, :], 1, PAD, jnp.float32)    # (1, 128)
    b3_p = _pad2(b3[None, :], 1, D_OUT, jnp.float32)  # (1, 2)
    return (w1_p, b1_p, w2_p, b2_p, w3_p, b3_p)


def _mlp_kernel(x_ref, w1_ref, b1_ref, w2_ref, b2_ref, w3_ref, b3_ref, o_ref):
    """Fused 3-layer MLP on one batch tile.

    x_ref : (tb, 30)   input rows (f32 or bf16; cast to bf16 in-kernel)
    w1_ref: (30, 128)  bf16, w2_ref: (128, 128) bf16, w3_ref: (128, 2) bf16
    b*_ref: f32 biases, o_ref: (tb, 2) output (f32 by default)
    """
    # In-kernel cast keeps the HBM read at x's native width and avoids a
    # separate XLA cast pass in the wrapper (kernel is HBM-bound).
    x = x_ref[...].astype(jnp.bfloat16)

    # Layer 1: Linear(30, 20) + ReLU  (zero-padded lanes stay zero through ReLU)
    h1 = jnp.dot(x, w1_ref[...], preferred_element_type=jnp.float32)
    h1 = jnp.maximum(h1 + b1_ref[...], 0.0)
    # Dropout(p=0.2) is the identity in eval mode (PyTorch eval semantics).
    # TODO(synk): training-mode dropout would use pltpu.prng_seed/prng_random_bits.

    # Layer 2: Linear(20, 10) + ReLU
    h2 = jnp.dot(h1.astype(jnp.bfloat16), w2_ref[...],
                 preferred_element_type=jnp.float32)
    h2 = jnp.maximum(h2 + b2_ref[...], 0.0)

    # Layer 3: Linear(10, 2)
    out = jnp.dot(h2.astype(jnp.bfloat16), w3_ref[...],
                  preferred_element_type=jnp.float32)
    o_ref[...] = (out + b3_ref[...]).astype(o_ref.dtype)


@functools.partial(jax.jit, static_argnames=("block_b", "out_dtype"))
def mynet_forward(x, prepped, block_b=2048, out_dtype=jnp.float32):
    """x: (B, 30) f32 or bf16 -> (B, 2) out_dtype. `prepped` from prepare_params()."""
    w1_p, b1_p, w2_p, b2_p, w3_p, b3_p = prepped
    B = x.shape[0]

    # Tile selection (all static):
    #  * no batch padding -- ragged last tile is masked by Pallas.
    #  * tiles 16-aligned (bf16 sublane packing), capped at block_b.
    #  * for mid/large batches force >= 2 tiles so the "parallel" batch axis
    #    can shard across both TensorCores on v7x.
    block_b = max(16, _round_up(block_b, 16))
    n_tiles = max(pl.cdiv(B, block_b), 2 if B >= 512 else 1)
    tb = min(block_b, _round_up(pl.cdiv(B, n_tiles), 16))
    grid = (pl.cdiv(B, tb),)

    out = pl.pallas_call(
        _mlp_kernel,
        out_shape=jax.ShapeDtypeStruct((B, D_OUT), out_dtype),
        grid_spec=pltpu.PrefetchScalarGridSpec(
            num_scalar_prefetch=0,
            grid=grid,
            in_specs=[
                pl.BlockSpec((tb, D_IN), lambda i: (i, 0)),    # x tile (tb, 30)
                pl.BlockSpec((D_IN, PAD), lambda i: (0, 0)),   # W1 (resident)
                pl.BlockSpec((1, PAD), lambda i: (0, 0)),      # b1
                pl.BlockSpec((PAD, PAD), lambda i: (0, 0)),    # W2
                pl.BlockSpec((1, PAD), lambda i: (0, 0)),      # b2
                pl.BlockSpec((PAD, D_OUT), lambda i: (0, 0)),  # W3
                pl.BlockSpec((1, D_OUT), lambda i: (0, 0)),    # b3
            ],
            out_specs=pl.BlockSpec((tb, D_OUT), lambda i: (i, 0)),
        ),
        compiler_params=pltpu.CompilerParams(
            dimension_semantics=("parallel",),
            # Large tiles fit v6e/v7x defaults; bump so v5e (16 MiB scoped
            # default) also takes tb up to 2048+ without shrinking fusion.
            vmem_limit_bytes=32 * 1024 * 1024,
        ),
    )(x, w1_p, b1_p, w2_p, b2_p, w3_p, b3_p)

    return out


def init_params(key):
    """Deterministic init matching nn.Linear shapes: W (out, in), b (out,)."""
    ks = jax.random.split(key, 6)

    def linear(kw, kb, fan_in, fan_out):
        bound = 1.0 / jnp.sqrt(fan_in)
        w = jax.random.uniform(kw, (fan_out, fan_in), jnp.float32, -bound, bound)
        b = jax.random.uniform(kb, (fan_out,), jnp.float32, -bound, bound)
        return w, b

    return (
        linear(ks[0], ks[1], D_IN, D_H1),
        linear(ks[2], ks[3], D_H1, D_H2),
        linear(ks[4], ks[5], D_H2, D_OUT),
    )


def _reference(x, params):
    (w1, b1), (w2, b2), (w3, b3) = params
    h = jnp.maximum(x @ w1.T + b1, 0.0)          # Dropout is identity in eval
    h = jnp.maximum(h @ w2.T + b2, 0.0)
    return h @ w3.T + b3


if __name__ == "__main__":
    key = jax.random.PRNGKey(0)
    k_x, k_p = jax.random.split(key)

    params = init_params(k_p)
    prepped = prepare_params(params)   # one-time prep, outside the jitted forward

    ok = True
    for B in (8, 50):                  # 50 exercises the masked ragged tile
        x = jax.random.normal(jax.random.fold_in(k_x, B), (B, D_IN), jnp.float32)
        out = jax.block_until_ready(mynet_forward(x, prepped))
        ref = _reference(x, params)
        assert out.shape == (B, D_OUT), out.shape
        # bf16 weights/activations vs f32 reference -> looser tolerance.
        ok &= bool(jnp.allclose(out, ref, atol=5e-2, rtol=5e-2))

    assert ok
    print("KERNEL_OK")
</pallas_src>

<mosaic_0001>
module attributes {stable_mosaic.version = 11 : i64} {
  func.func @_mlp_kernel(%arg0: i32, %arg1: memref<16x30xf32, #tpu.memory_space<vmem>>, %arg2: memref<30x128xbf16, #tpu.memory_space<vmem>>, %arg3: memref<1x128xf32, #tpu.memory_space<vmem>>, %arg4: memref<128x128xbf16, #tpu.memory_space<vmem>>, %arg5: memref<1x128xf32, #tpu.memory_space<vmem>>, %arg6: memref<128x2xbf16, #tpu.memory_space<vmem>>, %arg7: memref<1x2xf32, #tpu.memory_space<vmem>>, %arg8: memref<16x2xf32, #tpu.memory_space<vmem>>) attributes {dimension_semantics = [#tpu.dimension_semantics<parallel>], iteration_bounds = array<i64: 1>, scalar_prefetch = 0 : i64, scratch_operands = 0 : i64, tpu.core_type = #tpu.core_type<tc>, window_params = [{transform_indices = @transform_0, window_bounds = array<i64: 16, 30>}, {pipeline_mode = #tpu.pipeline_mode<synchronous>, transform_indices = @transform_1, window_bounds = array<i64: 30, 128>}, {pipeline_mode = #tpu.pipeline_mode<synchronous>, transform_indices = @transform_2, window_bounds = array<i64: 1, 128>}, {pipeline_mode = #tpu.pipeline_mode<synchronous>, transform_indices = @transform_3, window_bounds = array<i64: 128, 128>}, {pipeline_mode = #tpu.pipeline_mode<synchronous>, transform_indices = @transform_4, window_bounds = array<i64: 1, 128>}, {pipeline_mode = #tpu.pipeline_mode<synchronous>, transform_indices = @transform_5, window_bounds = array<i64: 128, 2>}, {pipeline_mode = #tpu.pipeline_mode<synchronous>, transform_indices = @transform_6, window_bounds = array<i64: 1, 2>}, {transform_indices = @transform_7, window_bounds = array<i64: 16, 2>}]} {
    %c0 = arith.constant 0 : index
    %c0_0 = arith.constant 0 : index
    %0 = vector.load %arg1[%c0, %c0_0] : memref<16x30xf32, #tpu.memory_space<vmem>>, vector<16x30xf32>
    %1 = arith.truncf %0 : vector<16x30xf32> to vector<16x30xbf16>
    %c0_1 = arith.constant 0 : index
    %c0_2 = arith.constant 0 : index
    %2 = vector.load %arg2[%c0_1, %c0_2] : memref<30x128xbf16, #tpu.memory_space<vmem>>, vector<30x128xbf16>
    %cst = arith.constant dense<0.000000e+00> : vector<16x128xf32>
    %3 = tpu.matmul %1, %2, %cst {dimension_numbers = #tpu.dot_dimension_numbers<[1], [0], [0], [1], [0, 0, 1, 1], [], []>} : vector<16x30xbf16>, vector<30x128xbf16>, vector<16x128xf32> -> vector<16x128xf32>
    %c0_3 = arith.constant 0 : index
    %c0_4 = arith.constant 0 : index
    %4 = vector.load %arg3[%c0_3, %c0_4] : memref<1x128xf32, #tpu.memory_space<vmem>>, vector<1x128xf32>
    %5 = vector.broadcast %4 : vector<1x128xf32> to vector<16x128xf32>
    %6 = arith.addf %3, %5 : vector<16x128xf32>
    %cst_5 = arith.constant 0.000000e+00 : f32
    %7 = vector.broadcast %cst_5 : f32 to vector<16x128xf32>
    %8 = arith.maximumf %6, %7 : vector<16x128xf32>
    %9 = arith.truncf %8 : vector<16x128xf32> to vector<16x128xbf16>
    %c0_6 = arith.constant 0 : index
    %c0_7 = arith.constant 0 : index
    %10 = vector.load %arg4[%c0_6, %c0_7] : memref<128x128xbf16, #tpu.memory_space<vmem>>, vector<128x128xbf16>
    %cst_8 = arith.constant dense<0.000000e+00> : vector<16x128xf32>
    %11 = tpu.matmul %9, %10, %cst_8 {dimension_numbers = #tpu.dot_dimension_numbers<[1], [0], [0], [1], [0, 0, 1, 1], [], []>} : vector<16x128xbf16>, vector<128x128xbf16>, vector<16x128xf32> -> vector<16x128xf32>
    %c0_9 = arith.constant 0 : index
    %c0_10 = arith.constant 0 : index
    %12 = vector.load %arg5[%c0_9, %c0_10] : memref<1x128xf32, #tpu.memory_space<vmem>>, vector<1x128xf32>
    %13 = vector.broadcast %12 : vector<1x128xf32> to vector<16x128xf32>
    %14 = arith.addf %11, %13 : vector<16x128xf32>
    %cst_11 = arith.constant 0.000000e+00 : f32
    %15 = vector.broadcast %cst_11 : f32 to vector<16x128xf32>
    %16 = arith.maximumf %14, %15 : vector<16x128xf32>
    %17 = arith.truncf %16 : vector<16x128xf32> to vector<16x128xbf16>
    %c0_12 = arith.constant 0 : index
    %c0_13 = arith.constant 0 : index
    %18 = vector.load %arg6[%c0_12, %c0_13] : memref<128x2xbf16, #tpu.memory_space<vmem>>, vector<128x2xbf16>
    %cst_14 = arith.constant dense<0.000000e+00> : vector<16x2xf32>
    %19 = tpu.matmul %17, %18, %cst_14 {dimension_numbers = #tpu.dot_dimension_numbers<[1], [0], [0], [1], [0, 0, 1, 1], [], []>} : vector<16x128xbf16>, vector<128x2xbf16>, vector<16x2xf32> -> vector<16x2xf32>
    %c0_15 = arith.constant 0 : index
    %c0_16 = arith.constant 0 : index
    %20 = vector.load %arg7[%c0_15, %c0_16] : memref<1x2xf32, #tpu.memory_space<vmem>>, vector<1x2xf32>
    %21 = vector.broadcast %20 : vector<1x2xf32> to vector<16x2xf32>
    %22 = arith.addf %19, %21 : vector<16x2xf32>
    %c0_17 = arith.constant 0 : index
    %c0_18 = arith.constant 0 : index
    %23 = vector.load %arg8[%c0_17, %c0_18] : memref<16x2xf32, #tpu.memory_space<vmem>>, vector<16x2xf32>
    tpu.vector_store %arg8[%c0_17, %c0_18], %22 {strides = array<i32>} : memref<16x2xf32, #tpu.memory_space<vmem>>, vector<16x2xf32>,
    return
  }
  func.func @transform_0(%arg0: i32) -> (i32, i32) {
    %c0_i32 = arith.constant 0 : i32
    %c0_i32_0 = arith.constant 0 : i32
    return %arg0, %c0_i32 : i32, i32
  }
  func.func @transform_1(%arg0: i32) -> (i32, i32) {
    %c0_i32 = arith.constant 0 : i32
    %c0_i32_0 = arith.constant 0 : i32
    %c0_i32_1 = arith.constant 0 : i32
    return %c0_i32, %c0_i32_0 : i32, i32
  }
  func.func @transform_2(%arg0: i32) -> (i32, i32) {
    %c0_i32 = arith.constant 0 : i32
    %c0_i32_0 = arith.constant 0 : i32
    %c0_i32_1 = arith.constant 0 : i32
    return %c0_i32, %c0_i32_0 : i32, i32
  }
  func.func @transform_3(%arg0: i32) -> (i32, i32) {
    %c0_i32 = arith.constant 0 : i32
    %c0_i32_0 = arith.constant 0 : i32
    %c0_i32_1 = arith.constant 0 : i32
    return %c0_i32, %c0_i32_0 : i32, i32
  }
  func.func @transform_4(%arg0: i32) -> (i32, i32) {
    %c0_i32 = arith.constant 0 : i32
    %c0_i32_0 = arith.constant 0 : i32
    %c0_i32_1 = arith.constant 0 : i32
    return %c0_i32, %c0_i32_0 : i32, i32
  }
  func.func @transform_5(%arg0: i32) -> (i32, i32) {
    %c0_i32 = arith.constant 0 : i32
    %c0_i32_0 = arith.constant 0 : i32
    %c0_i32_1 = arith.constant 0 : i32
    return %c0_i32, %c0_i32_0 : i32, i32
  }
  func.func @transform_6(%arg0: i32) -> (i32, i32) {
    %c0_i32 = arith.constant 0 : i32
    %c0_i32_0 = arith.constant 0 : i32
    %c0_i32_1 = arith.constant 0 : i32
    return %c0_i32, %c0_i32_0 : i32, i32
  }
  func.func @transform_7(%arg0: i32) -> (i32, i32) {
    %c0_i32 = arith.constant 0 : i32
    %c0_i32_0 = arith.constant 0 : i32
    return %arg0, %c0_i32 : i32, i32
  }
}

</mosaic_0001>

<llo_original>
// kernel: mynet_forward.1
$region0: #{mynet_forward.1}
  #allocation0 [shape = 'u32[]', space=smem, size = 0x4, offset = 0x4, fixed_abs, tag = 'smem constant byte address 0x4 - core index']
  #allocation1 [shape = 'u32[144,128]{1,0:T(1,128)}', space=vmem, size = 0x12000, scoped, tag = 'internal scratch']
  %s0 = inlined_call_operand.vmem [shape: f32[8,30], index: 0, kind: input, shape index: {}]
  %s1 = inlined_call_operand.hbm [shape: bf16[30,128], index: 1, kind: input, shape index: {}]
  %s2 = inlined_call_operand.vmem [shape: f32[1,128], index: 2, kind: input, shape index: {}]
  %s3 = inlined_call_operand.vmem [shape: bf16[128,128], index: 3, kind: input, shape index: {}]
  %s4 = inlined_call_operand.vmem [shape: f32[1,128], index: 4, kind: input, shape index: {}]
  %s5 = inlined_call_operand.vmem [shape: bf16[128,2], index: 5, kind: input, shape index: {}]
  %s6 = inlined_call_operand.vmem [shape: f32[1,2], index: 6, kind: input, shape index: {}]
  %s7 = inlined_call_operand.vmem [shape: f32[8,2], index: 7, kind: output, shape index: {}]
  %s8 = sld [smem:[#allocation0]]
  $region76: #{mynet_forward.1} parent=0
    _
  %s10 = ssub.s32 1, %s8
  %s11 = scalar_select 0, %s10, %s8
  $region1: #{mynet_forward.1} parent=0
    #allocation2 [shape = 'u8[8192]{0}', space=vmem, size = 0x2000, scoped, tag = 'input window, operand 1, single buffered']
    #allocation3 [shape = 's32[1]{0}', space=sflag, size = 0x4, scoped, tag = 'scoped memory for mynet_forward.1']
    #allocation4 [shape = 'u8[8192]{0}', space=vmem, size = 0x2000, scoped, tag = 'output window, operand 0, single buffered']
    %12 = vsyncpa [#allocation3], 0
    // Predicated region
    $region2: #{mynet_forward.1} parent=1 // pred_check
      _
    $region3: #{mynet_forward.1} parent=1 // pred_check_branch
      %14 = sbr.rel (0) target = $region5
    $region4: #{mynet_forward.1} parent=1 // pred_region
      _
    $region5: #{mynet_forward.1} parent=1 // pred_fallthru
      _
    // Predicated region
    $region6: #{mynet_forward.1} parent=1 // pred_check
      _
    $region7: #{mynet_forward.1} parent=1 // pred_check_branch
      %16 = sbr.rel (0) target = $region9
    $region8: #{mynet_forward.1} parent=1 // pred_region
      %s18 = ssub.s32 256, 256
      %19 = vsyncadd [#allocation3], %s18
      %s20 = sshll.u32 [#allocation2], 4
      %s21 = int_to_ptr.vmem [resolvable:$true] %s20
      %26 = dma.hbm_to_vmem [thread:$0]  %s1, 256, %s21, [#allocation3], 64, 64, 4
    $region9: #{mynet_forward.1} parent=1 // pred_fallthru
      _
    // Predicated region
    $region10: #{mynet_forward.1} parent=1 // pred_check
      _
    $region11: #{mynet_forward.1} parent=1 // pred_check_branch
      %28 = sbr.rel (0) target = $region13
    $region12: #{mynet_forward.1} parent=1 // pred_region
      _
    $region13: #{mynet_forward.1} parent=1 // pred_fallthru
      _
    // Predicated region
    $region14: #{mynet_forward.1} parent=1 // pred_check
      _
    $region15: #{mynet_forward.1} parent=1 // pred_check_branch
      %30 = sbr.rel (0) target = $region17
    $region16: #{mynet_forward.1} parent=1 // pred_region
      _
    $region17: #{mynet_forward.1} parent=1 // pred_fallthru
      _
    // Predicated region
    $region18: #{mynet_forward.1} parent=1 // pred_check
      _
    $region19: #{mynet_forward.1} parent=1 // pred_check_branch
      %32 = sbr.rel (0) target = $region21
    $region20: #{mynet_forward.1} parent=1 // pred_region
      _
    $region21: #{mynet_forward.1} parent=1 // pred_fallthru
      _
    // Predicated region
    $region22: #{mynet_forward.1} parent=1 // pred_check
      _
    $region23: #{mynet_forward.1} parent=1 // pred_check_branch
      %34 = sbr.rel (0) target = $region25
    $region24: #{mynet_forward.1} parent=1 // pred_region
      _
    $region25: #{mynet_forward.1} parent=1 // pred_fallthru
      _
    // Predicated region
    $region26: #{mynet_forward.1} parent=1 // pred_check
      _
    $region27: #{mynet_forward.1} parent=1 // pred_check_branch
      %36 = sbr.rel (0) target = $region29
    $region28: #{mynet_forward.1} parent=1 // pred_region
      _
    $region29: #{mynet_forward.1} parent=1 // pred_fallthru
      _
    // Predicated region
    $region30: #{mynet_forward.1} parent=1 // pred_check
      _
    $region31: #{mynet_forward.1} parent=1 // pred_check_branch
      %38 = sbr.rel (0) target = $region33
    $region32: #{mynet_forward.1} parent=1 // pred_region
      %39 = dma.done [#allocation3], 256
    $region33: #{mynet_forward.1} parent=1 // pred_fallthru
      _
    %v41 = vld [vmem:[%s0] sm:$0xff]
    %v42 = vld [vmem:[%s0 + $0x8] sm:$0xff]
    %v43 = vpack.c.bf16 %v42, %v41
    %v44 = vld [vmem:[#allocation2] sm:$0xf]
    %v45 = vld [vmem:[#allocation2 + $0x4] sm:$0xf]
    %v46 = vld [vmem:[#allocation2 + $0x8] sm:$0xf]
    %v47 = vld [vmem:[#allocation2 + $0xc] sm:$0x7]
    %v48 = vld [vmem:[%s2] sm:$0x1]
    %v50 = vlaneseq
    %v51 = vshrl.u32 %v50, 7
    %v52 = vsub.s32 0, %v51
    %v53 = vrot.slane %v48, %v52
    %v59 = vunpack.c.l.b16 %v44
    %v60 = vunpack.c.l.b16 %v45
    %v61 = vunpack.c.l.b16 %v46
    %v62 = vunpack.c.l.b16 %v47
    %v63 = vpack.c.b16 %v60, %v59
    %v64 = vpack.c.b16 %v62, %v61
    %vm66 = vcmask 244736
    %v68 = vsel %vm66, %v43, 0
    %vm70 = vcmask 1046528
    %v72 = vsel %vm70, %v64, 0
    %74 = vmatprep.subr.bf16.mxu0 0
    %75 = vmatpush1.bf16.msra.mxu0 %v63
    %76 = vmatprep.subr.bf16.mxu0 0
    %77 = vmatpush1.bf16.msra.mxu0 %v72
    %78 = vmatprep.subr.bf16.mxu0 0
    %79 = vmatpush1.bf16.msra.mxu0 0
    %80 = vmatprep.subr.bf16.mxu0 0
    %81 = vmatpush1.bf16.msra.mxu0 0
    %82 = vmatprep.subr.bf16.mxu0 0
    %83 = vmatpush1.bf16.msra.mxu0 0
    %84 = vmatprep.subr.bf16.mxu0 0
    %85 = vmatpush1.bf16.msra.mxu0 0
    %86 = vmatprep.subr.bf16.mxu0 0
    %87 = vmatpush1.bf16.msra.mxu0 0
    %88 = vmatprep.subr.bf16.mxu0 0
    %89 = vmatpush1.bf16.msra.mxu0 0
    %90 = vmatprep.subr.bf16.mxu0 0
    %91 = vmatpush1.bf16.msra.mxu0 0
    %92 = vmatprep.subr.bf16.mxu0 0
    %93 = vmatpush1.bf16.msra.mxu0 0
    %94 = vmatprep.subr.bf16.mxu0 0
    %95 = vmatpush1.bf16.msra.mxu0 0
    %96 = vmatprep.subr.bf16.mxu0 0
    %97 = vmatpush1.bf16.msra.mxu0 0
    %98 = vmatprep.subr.bf16.mxu0 0
    %99 = vmatpush1.bf16.msra.mxu0 0
    %100 = vmatprep.subr.bf16.mxu0 0
    %101 = vmatpush1.bf16.msra.mxu0 0
    %102 = vmatprep.subr.bf16.mxu0 0
    %103 = vmatpush1.bf16.msra.mxu0 0
    %104 = vmatprep.subr.bf16.mxu0 0
    %105 = vmatpush1.bf16.msra.mxu0 0
    %106 = vmatprep.mubr.bf16.mxu0 0
    %107 = vmatmul.mubr.bf16.gmra.mrb[0].mxu0 %v68
    %v108 = vpop.f32.mrb[0].mxu0
    %v109 = vadd.f32 %v53, %v108
    %v110 = vpop.f32.mrb[0].mxu0
    %v111 = vpop.f32.mrb[0].mxu0
    %v112 = vadd.f32 %v53, %v111
    %v113 = vpop.f32.mrb[0].mxu0
    %114 = vdwg.mxu0
    %v115 = vmax.f32 %v109, 0.0
    %v116 = vmax.f32 %v112, 0.0
    %v117 = vpack.c.bf16 %v116, %v115
    %v118 = vld [vmem:[%s3] sm:$0xf]
    %v119 = vld [vmem:[%s3 + $0x4] sm:$0xf]
    %v120 = vld [vmem:[%s3 + $0x8] sm:$0xf]
    %v121 = vld [vmem:[%s3 + $0xc] sm:$0xf]
    %v122 = vld [vmem:[%s3 + $0x10] sm:$0xf]
    %v123 = vld [vmem:[%s3 + $0x14] sm:$0xf]
    %v124 = vld [vmem:[%s3 + $0x18] sm:$0xf]
    %v125 = vld [vmem:[%s3 + $0x1c] sm:$0xf]
    %v126 = vld [vmem:[%s3 + $0x20] sm:$0xf]
    %v127 = vld [vmem:[%s3 + $0x24] sm:$0xf]
    %v128 = vld [vmem:[%s3 + $0x28] sm:$0xf]
    %v129 = vld [vmem:[%s3 + $0x2c] sm:$0xf]
    %v130 = vld [vmem:[%s3 + $0x30] sm:$0xf]
    %v131 = vld [vmem:[%s3 + $0x34] sm:$0xf]
    %v132 = vld [vmem:[%s3 + $0x38] sm:$0xf]
    %v133 = vld [vmem:[%s3 + $0x3c] sm:$0xf]
    %v134 = vld [vmem:[%s4] sm:$0x1]
    %v136 = vlaneseq
    %v137 = vshrl.u32 %v136, 7
    %v138 = vsub.s32 0, %v137
    %v139 = vrot.slane %v134, %v138
    %v157 = vunpack.c.l.b16 %v118
    %v158 = vunpack.c.l.b16 %v119
    %v159 = vunpack.c.l.b16 %v120
    %v160 = vunpack.c.l.b16 %v121
    %v161 = vunpack.c.l.b16 %v122
    %v162 = vunpack.c.l.b16 %v123
    %v163 = vunpack.c.l.b16 %v124
    %v164 = vunpack.c.l.b16 %v125
    %v165 = vunpack.c.l.b16 %v126
    %v166 = vunpack.c.l.b16 %v127
    %v167 = vunpack.c.l.b16 %v128
    %v168 = vunpack.c.l.b16 %v129
    %v169 = vunpack.c.l.b16 %v130
    %v170 = vunpack.c.l.b16 %v131
    %v171 = vunpack.c.l.b16 %v132
    %v172 = vunpack.c.l.b16 %v133
    %v173 = vpack.c.b16 %v158, %v157
    %v174 = vpack.c.b16 %v160, %v159
    %v175 = vpack.c.b16 %v162, %v161
    %v176 = vpack.c.b16 %v164, %v163
    %v177 = vpack.c.b16 %v166, %v165
    %v178 = vpack.c.b16 %v168, %v167
    %v179 = vpack.c.b16 %v170, %v169
    %v180 = vpack.c.b16 %v172, %v171
    %189 = vmatprep.subr.bf16.mxu0 0
    %190 = vmatpush1.bf16.msra.mxu0 %v173
    %191 = vmatprep.subr.bf16.mxu0 0
    %192 = vmatpush1.bf16.msra.mxu0 %v174
    %193 = vmatprep.subr.bf16.mxu0 0
    %194 = vmatpush1.bf16.msra.mxu0 %v175
    %195 = vmatprep.subr.bf16.mxu0 0
    %196 = vmatpush1.bf16.msra.mxu0 %v176
    %197 = vmatprep.subr.bf16.mxu0 0
    %198 = vmatpush1.bf16.msra.mxu0 %v177
    %199 = vmatprep.subr.bf16.mxu0 0
    %200 = vmatpush1.bf16.msra.mxu0 %v178
    %201 = vmatprep.subr.bf16.mxu0 0
    %202 = vmatpush1.bf16.msra.mxu0 %v179
    %203 = vmatprep.subr.bf16.mxu0 0
    %204 = vmatpush1.bf16.msra.mxu0 %v180
    %205 = vmatprep.subr.bf16.mxu0 0
    %206 = vmatpush1.bf16.msra.mxu0 0
    %207 = vmatprep.subr.bf16.mxu0 0
    %208 = vmatpush1.bf16.msra.mxu0 0
    %209 = vmatprep.subr.bf16.mxu0 0
    %210 = vmatpush1.bf16.msra.mxu0 0
    %211 = vmatprep.subr.bf16.mxu0 0
    %212 = vmatpush1.bf16.msra.mxu0 0
    %213 = vmatprep.subr.bf16.mxu0 0
    %214 = vmatpush1.bf16.msra.mxu0 0
    %215 = vmatprep.subr.bf16.mxu0 0
    %216 = vmatpush1.bf16.msra.mxu0 0
    %217 = vmatprep.subr.bf16.mxu0 0
    %218 = vmatpush1.bf16.msra.mxu0 0
    %219 = vmatprep.subr.bf16.mxu0 0
    %220 = vmatpush1.bf16.msra.mxu0 0
    %221 = vmatprep.mubr.bf16.mxu0 0
    %222 = vmatmul.mubr.bf16.gmra.mrb[0].mxu0 %v117
    %v223 = vpop.f32.mrb[0].mxu0
    %v224 = vadd.f32 %v139, %v223
    %v225 = vpop.f32.mrb[0].mxu0
    %v226 = vpop.f32.mrb[0].mxu0
    %v227 = vadd.f32 %v139, %v226
    %v228 = vpop.f32.mrb[0].mxu0
    %229 = vdwg.mxu0
    %v230 = vmax.f32 %v224, 0.0
    %v231 = vmax.f32 %v227, 0.0
    %v232 = vpack.c.bf16 %v231, %v230
    %v233 = vld [vmem:[%s5] sm:$0xf]
    %v234 = vld [vmem:[%s5 + $0x4] sm:$0xf]
    %v235 = vld [vmem:[%s5 + $0x8] sm:$0xf]
    %v236 = vld [vmem:[%s5 + $0xc] sm:$0xf]
    %v237 = vld [vmem:[%s5 + $0x10] sm:$0xf]
    %v238 = vld [vmem:[%s5 + $0x14] sm:$0xf]
    %v239 = vld [vmem:[%s5 + $0x18] sm:$0xf]
    %v240 = vld [vmem:[%s5 + $0x1c] sm:$0xf]
    %v241 = vld [vmem:[%s5 + $0x20] sm:$0xf]
    %v242 = vld [vmem:[%s5 + $0x24] sm:$0xf]
    %v243 = vld [vmem:[%s5 + $0x28] sm:$0xf]
    %v244 = vld [vmem:[%s5 + $0x2c] sm:$0xf]
    %v245 = vld [vmem:[%s5 + $0x30] sm:$0xf]
    %v246 = vld [vmem:[%s5 + $0x34] sm:$0xf]
    %v247 = vld [vmem:[%s5 + $0x38] sm:$0xf]
    %v248 = vld [vmem:[%s5 + $0x3c] sm:$0xf]
    %v249 = vld [vmem:[%s6] sm:$0x1]
    %v251 = vlaneseq
    %v252 = vshrl.u32 %v251, 7
    %v253 = vsub.s32 0, %v252
    %v254 = vrot.slane %v249, %v253
    %v272 = vunpack.c.l.b16 %v233
    %v273 = vunpack.c.l.b16 %v234
    %v274 = vunpack.c.l.b16 %v235
    %v275 = vunpack.c.l.b16 %v236
    %v276 = vunpack.c.l.b16 %v237
    %v277 = vunpack.c.l.b16 %v238
    %v278 = vunpack.c.l.b16 %v239
    %v279 = vunpack.c.l.b16 %v240
    %v280 = vunpack.c.l.b16 %v241
    %v281 = vunpack.c.l.b16 %v242
    %v282 = vunpack.c.l.b16 %v243
    %v283 = vunpack.c.l.b16 %v244
    %v284 = vunpack.c.l.b16 %v245
    %v285 = vunpack.c.l.b16 %v246
    %v286 = vunpack.c.l.b16 %v247
    %v287 = vunpack.c.l.b16 %v248
    %v288 = vpack.c.b16 %v273, %v272
    %v289 = vpack.c.b16 %v275, %v274
    %v290 = vpack.c.b16 %v277, %v276
    %v291 = vpack.c.b16 %v279, %v278
    %v292 = vpack.c.b16 %v281, %v280
    %v293 = vpack.c.b16 %v283, %v282
    %v294 = vpack.c.b16 %v285, %v284
    %v295 = vpack.c.b16 %v287, %v286
    %304 = vmatprep.subr.bf16.mxu0 0
    %305 = vmatpush1.bf16.msra.mxu0 %v288
    %306 = vmatprep.subr.bf16.mxu0 0
    %307 = vmatpush1.bf16.msra.mxu0 %v289
    %308 = vmatprep.subr.bf16.mxu0 0
    %309 = vmatpush1.bf16.msra.mxu0 %v290
    %310 = vmatprep.subr.bf16.mxu0 0
    %311 = vmatpush1.bf16.msra.mxu0 %v291
    %312 = vmatprep.subr.bf16.mxu0 0
    %313 = vmatpush1.bf16.msra.mxu0 %v292
    %314 = vmatprep.subr.bf16.mxu0 0
    %315 = vmatpush1.bf16.msra.mxu0 %v293
    %316 = vmatprep.subr.bf16.mxu0 0
    %317 = vmatpush1.bf16.msra.mxu0 %v294
    %318 = vmatprep.subr.bf16.mxu0 0
    %319 = vmatpush1.bf16.msra.mxu0 %v295
    %320 = vmatprep.subr.bf16.mxu0 0
    %321 = vmatpush1.bf16.msra.mxu0 0
    %322 = vmatprep.subr.bf16.mxu0 0
    %323 = vmatpush1.bf16.msra.mxu0 0
    %324 = vmatprep.subr.bf16.mxu0 0
    %325 = vmatpush1.bf16.msra.mxu0 0
    %326 = vmatprep.subr.bf16.mxu0 0
    %327 = vmatpush1.bf16.msra.mxu0 0
    %328 = vmatprep.subr.bf16.mxu0 0
    %329 = vmatpush1.bf16.msra.mxu0 0
    %330 = vmatprep.subr.bf16.mxu0 0
    %331 = vmatpush1.bf16.msra.mxu0 0
    %332 = vmatprep.subr.bf16.mxu0 0
    %333 = vmatpush1.bf16.msra.mxu0 0
    %334 = vmatprep.subr.bf16.mxu0 0
    %335 = vmatpush1.bf16.msra.mxu0 0
    %336 = vmatprep.mubr.bf16.mxu0 0
    %337 = vmatmul.mubr.bf16.gmra.mrb[0].mxu0 %v232
    %v338 = vpop.f32.mrb[0].mxu0
    %v339 = vadd.f32 %v254, %v338
    %v340 = vpop.f32.mrb[0].mxu0
    %v341 = vpop.f32.mrb[0].mxu0
    %v342 = vadd.f32 %v254, %v341
    %v343 = vpop.f32.mrb[0].mxu0
    %344 = vdwg.mxu0
    %vm345 = vcmask 15360
    %346 = vst.msk [vmem:[#allocation4] sm:$0xff] %vm345, %v339
    %347 = vst.msk [vmem:[#allocation4 + $0x8] sm:$0xff] %vm345, %v342
    // Predicated region
    $region34: #{mynet_forward.1} parent=1 // pred_check
      _
    $region35: #{mynet_forward.1} parent=1 // pred_check_branch
      %349 = sbr.rel (0) target = $region37
    $region36: #{mynet_forward.1} parent=1 // pred_region
      // Predicated region
      $region38: #{mynet_forward.1} parent=36 // pred_check
        _
      $region39: #{mynet_forward.1} parent=36 // pred_check_branch
        %351 = sbr.rel (0) target = $region41
      $region40: #{mynet_forward.1} parent=36 // pred_region
        // Predicated region
        $region42: #{mynet_forward.1} parent=40 // pred_check
          _
        $region43: #{mynet_forward.1} parent=40 // pred_check_branch
          %353 = sbr.rel (0) target = $region45
        $region44: #{mynet_forward.1} parent=40 // pred_region
          // Predicated region
          $region57: #{mynet_forward.1} parent=44 // pred_check
            _
          $region58: #{mynet_forward.1} parent=44 // pred_check_branch
            %368 = sbr.rel (0) target = $region60
          $region59: #{mynet_forward.1} parent=44 // pred_region
            loop: start=0, step=1, limit=1
            $region61: #{mynet_forward.1} parent=59 // loop_pre_header
              _
            $region62: #{mynet_forward.1} parent=59 // loop_header
              %s370 = sphi 0, %s374
              %p371 = scmp.ge.s32.totalorder %s370, 1
              %s375 = sphi [#allocation4], [#allocation4]
              %s376 = sphi %s7, %s7
            $region63: #{mynet_forward.1} parent=59 // loop_header_branch
              %373 = sbr.rel (%p371) target = $region67
            $region64: #{mynet_forward.1} parent=59 // loop_body
              %v377 = vld [vmem:[%s375] sm:$0xff]
              %378 = vst [vmem:[%s376] sm:$0xff] %v377
            $region65: #{mynet_forward.1} parent=59 // loop_footer
              %s374 = sadd.s32 1, %s370
            $region66: #{mynet_forward.1} parent=59 // loop_footer_branch
              %369 = sbr.rel target = $region62
            $region67: #{mynet_forward.1} parent=59 // loop_exit
              _
          $region60: #{mynet_forward.1} parent=44 // pred_fallthru
            _
          // Predicated region
          $region68: #{mynet_forward.1} parent=44 // pred_check
            _
          $region69: #{mynet_forward.1} parent=44 // pred_check_branch
            %380 = sbr.rel target = $region71
          $region70: #{mynet_forward.1} parent=44 // pred_region
            _
          $region71: #{mynet_forward.1} parent=44 // pred_fallthru
            _
        $region45: #{mynet_forward.1} parent=40 // pred_fallthru
          _
        // Predicated region
        $region46: #{mynet_forward.1} parent=40 // pred_check
          _
        $region47: #{mynet_forward.1} parent=40 // pred_check_branch
          %355 = sbr.rel target = $region49
        $region48: #{mynet_forward.1} parent=40 // pred_region
          loop: start=0, step=1, limit=1
          $region50: #{mynet_forward.1} parent=48 // loop_pre_header
            _
          $region51: #{mynet_forward.1} parent=48 // loop_header
            %s358 = sphi 0, %s362
            %p359 = scmp.ge.s32.totalorder %s358, 1
            %s363 = sphi [#allocation4], [#allocation4]
            %s364 = sphi %s7, %s7
          $region52: #{mynet_forward.1} parent=48 // loop_header_branch
            %361 = sbr.rel (%p359) target = $region56
          $region53: #{mynet_forward.1} parent=48 // loop_body
            %v365 = vld [vmem:[%s363] sm:$0xff]
            %366 = vst [vmem:[%s364] sm:$0xff] %v365
          $region54: #{mynet_forward.1} parent=48 // loop_footer
            %s362 = sadd.s32 1, %s358
          $region55: #{mynet_forward.1} parent=48 // loop_footer_branch
            %357 = sbr.rel target = $region51
          $region56: #{mynet_forward.1} parent=48 // loop_exit
            _
        $region49: #{mynet_forward.1} parent=40 // pred_fallthru
          _
      $region41: #{mynet_forward.1} parent=36 // pred_fallthru
        _
      %381 = vnop
    $region37: #{mynet_forward.1} parent=1 // pred_fallthru
      _
    // Predicated region
    $region72: #{mynet_forward.1} parent=1 // pred_check
      _
    $region73: #{mynet_forward.1} parent=1 // pred_check_branch
      %383 = sbr.rel (0) target = $region75
    $region74: #{mynet_forward.1} parent=1 // pred_region
      _
    $region75: #{mynet_forward.1} parent=1 // pred_fallthru
      _
    %384 = vsyncpa [#allocation3], 1

</llo_original>
